<compile_context>
chip_gen: v5e
topology: v5e:2x2
jax: 0.10.0
libtpu: 0.0.40
codegen_flags: <defaults>
</compile_context>

<pallas_src>
import functools

import jax
import jax.numpy as jnp
from jax.experimental import pallas as pl
from jax.experimental.pallas import tpu as pltpu


def _av_attmap_loss_kernel(imgp_ref, imgg_ref, aud_ref, wavt_ref, out_ref,
                           q_ref, sp_ref, sg_ref, *, inv_norm):
    """One (b, s_tile) grid step of the audio-visual attention-map MSE loss.

    imgp_ref / imgg_ref : [C, Ts]   image tiles, channel-major ([B, C, S]) layout
    aud_ref             : [1, A]    audio features for batch element b
    wavt_ref            : [C, A]    folded frozen weights (wv @ wa.T)
    out_ref             : [1, 128]  per-b loss partial (lane-broadcast), VMEM
    q_ref               : [C, 1]    scratch: audio query in channel space
    sp_ref / sg_ref     : [1, S]    scratch: cached attention scores (pred / gt)
    """
    s_idx = pl.program_id(1)
    n_s = pl.num_programs(1)
    _, ts = imgp_ref.shape

    # --- audio branch (folded): q = (wv @ wa.T) @ aud_b, once per batch element ---
    @pl.when(s_idx == 0)
    def _():
        aud = aud_ref[...].astype(jnp.float32)              # [1, A]
        wavt = wavt_ref[...].astype(jnp.float32)            # [C, A]
        # VPU broadcast-multiply + lane reduce; avoids an under-shaped MXU op.
        q_ref[...] = jnp.sum(wavt * aud, axis=1, keepdims=True)   # [C, 1]

    q = q_ref[...]                                          # [C, 1] f32

    # --- visual branch (folded): scores[s] = sum_c q[c] * img[c, s] ---------------
    imgp = imgp_ref[...].astype(jnp.float32)                # [C, Ts]
    imgg = imgg_ref[...].astype(jnp.float32)
    sp = jnp.sum(q * imgp, axis=0, keepdims=True)           # [1, Ts] (VPU + sublane reduce)
    sg = jnp.sum(q * imgg, axis=0, keepdims=True)

    off = s_idx * ts
    if ts % 128 == 0:
        off = pl.multiple_of(off, 128)
    sp_ref[:, pl.ds(off, ts)] = sp
    sg_ref[:, pl.ds(off, ts)] = sg

    # --- finalize on the last S tile: spatial softmax, then squared error ---------
    @pl.when(s_idx == n_s - 1)
    def _():
        def softmax(x):
            m = jnp.max(x, axis=-1, keepdims=True)
            e = jnp.exp(x - m)
            return e / jnp.sum(e, axis=-1, keepdims=True)

        ap = softmax(sp_ref[...])                           # [1, S]
        ag = softmax(sg_ref[...])
        d = ap - ag
        mse_b = jnp.sum(d * d, axis=-1, keepdims=True) * inv_norm   # [1, 1]
        out_ref[...] = jnp.broadcast_to(mse_b, out_ref.shape)


def _pick_s_tile(S, C, itemsize, *, max_s_tile=2048, tile_budget_bytes=8 << 20):
    """Largest multiple-of-128 tile dividing S that fits the double-buffer budget
    (2 image inputs x 2 pipeline buffers x C*Ts*itemsize bytes)."""
    if S % 128 != 0:
        return S                       # single full-S block (full-dim rule)
    budget_ts = tile_budget_bytes // max(1, 4 * C * itemsize)
    cap = min(S, max_s_tile, max(128, (budget_ts // 128) * 128))
    best = 128
    t = 128
    while t <= cap:
        if S % t == 0:
            best = t
        t += 128
    return best


def audio_visual_attention_loss(image_pred, image_gt, audio, wv, wa, *,
                                max_s_tile=2048):
    """MSE between avnet attention maps of image_pred and image_gt.

    image_pred / image_gt : [B, C, H, W]  (NCHW, like PyTorch)
    audio                 : [B, A]
    wv : [C, D] frozen 1x1-conv (visual) weights;  wa : [A, D] frozen audio linear.
    """
    B, C, H, W = image_pred.shape
    A = audio.shape[1]
    S = H * W

    # Frozen-weight fold (everything before the softmax is linear):
    #   scores = (aud @ wa) @ (img @ wv).T == aud @ (wa @ wv.T) @ img.T
    # so precompute W_av^T = wv @ wa.T once; the kernel contracts the image over C.
    w_av_t = jnp.dot(wv, wa.T, preferred_element_type=jnp.float32)   # [C, A]

    # Free reshapes only — no NCHW->NHWC transpose. Channel-major [B, C, S] keeps
    # S (multiple of 128 for typical feature maps) on the lane axis.
    imgp = image_pred.reshape(B, C, S)
    imgg = image_gt.reshape(B, C, S)
    aud3 = audio.reshape(B, 1, A)

    ts = _pick_s_tile(S, C, imgp.dtype.itemsize, max_s_tile=max_s_tile)
    assert S % ts == 0
    n_s = S // ts

    kernel = functools.partial(_av_attmap_loss_kernel,
                               inv_norm=1.0 / float(B * S))

    out = pl.pallas_call(
        kernel,
        out_shape=jax.ShapeDtypeStruct((B, 1, 128), jnp.float32),
        grid=(B, n_s),
        in_specs=[
            pl.BlockSpec((None, C, ts), lambda b, s: (b, 0, s)),   # image_pred tile
            pl.BlockSpec((None, C, ts), lambda b, s: (b, 0, s)),   # image_gt tile
            pl.BlockSpec((None, 1, A), lambda b, s: (b, 0, 0)),    # audio row b
            pl.BlockSpec((C, A), lambda b, s: (0, 0)),             # folded frozen weights
        ],
        out_specs=pl.BlockSpec((None, 1, 128), lambda b, s: (b, 0, 0)),
        scratch_shapes=[
            pltpu.VMEM((C, 1), jnp.float32),     # q: audio query in channel space
            pltpu.VMEM((1, S), jnp.float32),     # cached scores, pred
            pltpu.VMEM((1, S), jnp.float32),     # cached scores, gt
        ],
        compiler_params=pltpu.CompilerParams(
            dimension_semantics=("parallel", "arbitrary"),
            vmem_limit_bytes=32 * 1024 * 1024,
        ),
    )(imgp, imgg, aud3, w_av_t)

    # Per-b lane-broadcast partials -> scalar mean (tiny [B] reduce in the wrapper).
    return jnp.sum(out[:, 0, 0])


if __name__ == "__main__":
    # Small deterministic shapes consistent with the forward pass.
    B, C, H, W = 2, 4, 16, 16     # images [B, C, H, W]
    A, D = 32, 32                 # audio features, shared hidden dim

    key = jax.random.PRNGKey(0)
    k1, k2, k3, k4, k5 = jax.random.split(key, 5)

    image_pred = jax.random.normal(k1, (B, C, H, W), dtype=jnp.float32)
    # ground-truth image = small perturbation of prediction
    image_gt = image_pred + 0.1 * jax.random.normal(k2, (B, C, H, W), dtype=jnp.float32)
    audio = jax.random.normal(k3, (B, A), dtype=jnp.float32)

    # Frozen (requires_grad=False) avnet parameters, deterministic init.
    wv = 0.1 * jax.random.normal(k4, (C, D), dtype=jnp.float32)
    wa = 0.1 * jax.random.normal(k5, (A, D), dtype=jnp.float32)

    # max_s_tile=128 so the S=256 demo exercises the multi-S-tile pipelined path
    # (scratch score cache + pl.when finalize on the last tile).
    loss = audio_visual_attention_loss(image_pred, image_gt, audio, wv, wa,
                                       max_s_tile=128)
    loss = jax.block_until_ready(loss)

    # Pure-JAX reference of the same synthetic frozen avnet forward (unfolded form).
    def ref_loss(ip, ig, au, wv_, wa_):
        Bb, Cc, Hh, Ww = ip.shape
        Ss = Hh * Ww

        def attmap(img):
            x = img.reshape(Bb, Cc, Ss).transpose(0, 2, 1)        # [B, S, C]
            vis = jnp.einsum('bsc,cd->bsd', x, wv_)               # [B, S, D]
            aude = jnp.dot(au, wa_)                               # [B, D]
            sc = jnp.einsum('bd,bsd->bs', aude, vis)              # [B, S]
            return jax.nn.softmax(sc, axis=-1)

        ap = attmap(ip)
        ag = attmap(ig)
        return jnp.mean((ap - ag) ** 2)

    ref = ref_loss(image_pred, image_gt, audio, wv, wa)

    assert jnp.isfinite(loss), "loss is not finite"
    assert jnp.allclose(loss, ref, rtol=5e-3, atol=1e-12), (loss, ref)
    print("KERNEL_OK")
</pallas_src>

<mosaic_0001>
module attributes {stable_mosaic.version = 11 : i64} {
  func.func @_av_attmap_loss_kernel(%arg0: i32, %arg1: i32, %arg2: memref<1x4x128xf32, #tpu.memory_space<vmem>>, %arg3: memref<1x4x128xf32, #tpu.memory_space<vmem>>, %arg4: memref<1x1x32xf32, #tpu.memory_space<vmem>>, %arg5: memref<4x32xf32, #tpu.memory_space<vmem>>, %arg6: memref<1x1x128xf32, #tpu.memory_space<vmem>>, %arg7: memref<4x1xf32, #tpu.memory_space<vmem>>, %arg8: memref<1x256xf32, #tpu.memory_space<vmem>>, %arg9: memref<1x256xf32, #tpu.memory_space<vmem>>) attributes {dimension_semantics = [#tpu.dimension_semantics<parallel>, #tpu.dimension_semantics<arbitrary>], iteration_bounds = array<i64: 2, 2>, scalar_prefetch = 0 : i64, scratch_operands = 3 : i64, tpu.core_type = #tpu.core_type<tc>, window_params = [{transform_indices = @transform_0, window_bounds = array<i64: 1, 4, 128>}, {transform_indices = @transform_1, window_bounds = array<i64: 1, 4, 128>}, {transform_indices = @transform_2, window_bounds = array<i64: 1, 1, 32>}, {pipeline_mode = #tpu.pipeline_mode<synchronous>, transform_indices = @transform_3, window_bounds = array<i64: 4, 32>}, {transform_indices = @transform_4, window_bounds = array<i64: 1, 1, 128>}]} {
    %c0_i32 = arith.constant 0 : i32
    %0 = arith.cmpi eq, %arg1, %c0_i32 : i32
    %1 = arith.extui %0 : i1 to i32
    %c0_i32_0 = arith.constant 0 : i32
    %2 = arith.cmpi ne, %1, %c0_i32_0 : i32
    scf.if %2 {
      %c0_12 = arith.constant 0 : index
      %c0_13 = arith.constant 0 : index
      %c0_14 = arith.constant 0 : index
      %25 = vector.load %arg4[%c0_12, %c0_13, %c0_14] : memref<1x1x32xf32, #tpu.memory_space<vmem>>, vector<1x1x32xf32>
      %26 = vector.shape_cast %25 : vector<1x1x32xf32> to vector<1x32xf32>
      %c0_15 = arith.constant 0 : index
      %c0_16 = arith.constant 0 : index
      %27 = vector.load %arg5[%c0_15, %c0_16] : memref<4x32xf32, #tpu.memory_space<vmem>>, vector<4x32xf32>
      %28 = vector.broadcast %26 : vector<1x32xf32> to vector<4x32xf32>
      %29 = arith.mulf %27, %28 : vector<4x32xf32>
      %cst_17 = arith.constant dense<0.000000e+00> : vector<4xf32>
      %30 = vector.multi_reduction <add>, %29, %cst_17 [1] : vector<4x32xf32> to vector<4xf32>
      %31 = vector.shape_cast %30 : vector<4xf32> to vector<4x1xf32>
      %c0_18 = arith.constant 0 : index
      %c0_19 = arith.constant 0 : index
      %32 = vector.load %arg7[%c0_18, %c0_19] : memref<4x1xf32, #tpu.memory_space<vmem>>, vector<4x1xf32>
      tpu.vector_store %arg7[%c0_18, %c0_19], %31 {strides = array<i32>} : memref<4x1xf32, #tpu.memory_space<vmem>>, vector<4x1xf32>,
    } else {
    }
    %c0 = arith.constant 0 : index
    %c0_1 = arith.constant 0 : index
    %3 = vector.load %arg7[%c0, %c0_1] : memref<4x1xf32, #tpu.memory_space<vmem>>, vector<4x1xf32>
    %c0_2 = arith.constant 0 : index
    %c0_3 = arith.constant 0 : index
    %c0_4 = arith.constant 0 : index
    %4 = vector.load %arg2[%c0_2, %c0_3, %c0_4] : memref<1x4x128xf32, #tpu.memory_space<vmem>>, vector<1x4x128xf32>
    %5 = vector.shape_cast %4 : vector<1x4x128xf32> to vector<4x128xf32>
    %c0_5 = arith.constant 0 : index
    %c0_6 = arith.constant 0 : index
    %c0_7 = arith.constant 0 : index
    %6 = vector.load %arg3[%c0_5, %c0_6, %c0_7] : memref<1x4x128xf32, #tpu.memory_space<vmem>>, vector<1x4x128xf32>
    %7 = vector.shape_cast %6 : vector<1x4x128xf32> to vector<4x128xf32>
    %8 = vector.broadcast %3 : vector<4x1xf32> to vector<4x128xf32>
    %9 = arith.mulf %8, %5 : vector<4x128xf32>
    %cst = arith.constant dense<0.000000e+00> : vector<128xf32>
    %10 = vector.multi_reduction <add>, %9, %cst [0] : vector<4x128xf32> to vector<128xf32>
    %11 = vector.shape_cast %10 : vector<128xf32> to vector<1x128xf32>
    %12 = vector.broadcast %3 : vector<4x1xf32> to vector<4x128xf32>
    %13 = arith.mulf %12, %7 : vector<4x128xf32>
    %cst_8 = arith.constant dense<0.000000e+00> : vector<128xf32>
    %14 = vector.multi_reduction <add>, %13, %cst_8 [0] : vector<4x128xf32> to vector<128xf32>
    %15 = vector.shape_cast %14 : vector<128xf32> to vector<1x128xf32>
    %c128_i32 = arith.constant 128 : i32
    %16 = arith.muli %arg1, %c128_i32 : i32
    %17 = tpu.assume_multiple %16, 128 : i32
    %c0_9 = arith.constant 0 : index
    %18 = arith.index_cast %17 : i32 to index
    %19 = vector.load %arg8[%c0_9, %18] : memref<1x256xf32, #tpu.memory_space<vmem>>, vector<1x128xf32>
    tpu.vector_store %arg8[%c0_9, %18], %11 {strides = array<i32>} : memref<1x256xf32, #tpu.memory_space<vmem>>, vector<1x128xf32>,
    %c0_10 = arith.constant 0 : index
    %20 = arith.index_cast %17 : i32 to index
    %21 = vector.load %arg9[%c0_10, %20] : memref<1x256xf32, #tpu.memory_space<vmem>>, vector<1x128xf32>
    tpu.vector_store %arg9[%c0_10, %20], %15 {strides = array<i32>} : memref<1x256xf32, #tpu.memory_space<vmem>>, vector<1x128xf32>,
    %c1_i32 = arith.constant 1 : i32
    %22 = arith.cmpi eq, %arg1, %c1_i32 : i32
    %23 = arith.extui %22 : i1 to i32
    %c0_i32_11 = arith.constant 0 : i32
    %24 = arith.cmpi ne, %23, %c0_i32_11 : i32
    scf.if %24 {
      %c0_12 = arith.constant 0 : index
      %c0_13 = arith.constant 0 : index
      %25 = vector.load %arg8[%c0_12, %c0_13] : memref<1x256xf32, #tpu.memory_space<vmem>>, vector<1x256xf32>
      %cst_14 = arith.constant dense<0xFF800000> : vector<1xf32>
      %26 = vector.multi_reduction <maximumf>, %25, %cst_14 [1] : vector<1x256xf32> to vector<1xf32>
      %27 = vector.shape_cast %26 : vector<1xf32> to vector<1x1xf32>
      %28 = vector.broadcast %27 : vector<1x1xf32> to vector<1x256xf32>
      %29 = arith.subf %25, %28 : vector<1x256xf32>
      %30 = math.exp %29 : vector<1x256xf32>
      %cst_15 = arith.constant dense<0.000000e+00> : vector<1xf32>
      %31 = vector.multi_reduction <add>, %30, %cst_15 [1] : vector<1x256xf32> to vector<1xf32>
      %32 = vector.shape_cast %31 : vector<1xf32> to vector<1x1xf32>
      %33 = vector.broadcast %32 : vector<1x1xf32> to vector<1x256xf32>
      %34 = arith.divf %30, %33 : vector<1x256xf32>
      %c0_16 = arith.constant 0 : index
      %c0_17 = arith.constant 0 : index
      %35 = vector.load %arg9[%c0_16, %c0_17] : memref<1x256xf32, #tpu.memory_space<vmem>>, vector<1x256xf32>
      %cst_18 = arith.constant dense<0xFF800000> : vector<1xf32>
      %36 = vector.multi_reduction <maximumf>, %35, %cst_18 [1] : vector<1x256xf32> to vector<1xf32>
      %37 = vector.shape_cast %36 : vector<1xf32> to vector<1x1xf32>
      %38 = vector.broadcast %37 : vector<1x1xf32> to vector<1x256xf32>
      %39 = arith.subf %35, %38 : vector<1x256xf32>
      %40 = math.exp %39 : vector<1x256xf32>
      %cst_19 = arith.constant dense<0.000000e+00> : vector<1xf32>
      %41 = vector.multi_reduction <add>, %40, %cst_19 [1] : vector<1x256xf32> to vector<1xf32>
      %42 = vector.shape_cast %41 : vector<1xf32> to vector<1x1xf32>
      %43 = vector.broadcast %42 : vector<1x1xf32> to vector<1x256xf32>
      %44 = arith.divf %40, %43 : vector<1x256xf32>
      %45 = arith.subf %34, %44 : vector<1x256xf32>
      %46 = arith.mulf %45, %45 : vector<1x256xf32>
      %cst_20 = arith.constant dense<0.000000e+00> : vector<1xf32>
      %47 = vector.multi_reduction <add>, %46, %cst_20 [1] : vector<1x256xf32> to vector<1xf32>
      %48 = vector.shape_cast %47 : vector<1xf32> to vector<1x1xf32>
      %cst_21 = arith.constant 0.001953125 : f32
      %49 = vector.broadcast %cst_21 : f32 to vector<1x1xf32>
      %50 = arith.mulf %48, %49 : vector<1x1xf32>
      %51 = vector.shape_cast %50 : vector<1x1xf32> to vector<1x1xf32>
      %52 = vector.broadcast %51 : vector<1x1xf32> to vector<1x128xf32>
      %c0_22 = arith.constant 0 : index
      %c0_23 = arith.constant 0 : index
      %c0_24 = arith.constant 0 : index
      %53 = vector.load %arg6[%c0_22, %c0_23, %c0_24] : memref<1x1x128xf32, #tpu.memory_space<vmem>>, vector<1x1x128xf32>
      %54 = vector.shape_cast %53 : vector<1x1x128xf32> to vector<1x128xf32>
      %55 = vector.shape_cast %52 : vector<1x128xf32> to vector<1x1x128xf32>
      tpu.vector_store %arg6[%c0_22, %c0_23, %c0_24], %55 {strides = array<i32>} : memref<1x1x128xf32, #tpu.memory_space<vmem>>, vector<1x1x128xf32>,
    } else {
    }
    return
  }
  func.func @transform_0(%arg0: i32, %arg1: i32) -> (i32, i32, i32) {
    %c0_i32 = arith.constant 0 : i32
    %c0_i32_0 = arith.constant 0 : i32
    return %arg0, %c0_i32, %arg1 : i32, i32, i32
  }
  func.func @transform_1(%arg0: i32, %arg1: i32) -> (i32, i32, i32) {
    %c0_i32 = arith.constant 0 : i32
    %c0_i32_0 = arith.constant 0 : i32
    return %arg0, %c0_i32, %arg1 : i32, i32, i32
  }
  func.func @transform_2(%arg0: i32, %arg1: i32) -> (i32, i32, i32) {
    %c0_i32 = arith.constant 0 : i32
    %c0_i32_0 = arith.constant 0 : i32
    %c0_i32_1 = arith.constant 0 : i32
    return %arg0, %c0_i32, %c0_i32_0 : i32, i32, i32
  }
  func.func @transform_3(%arg0: i32, %arg1: i32) -> (i32, i32) {
    %c0_i32 = arith.constant 0 : i32
    %c0_i32_0 = arith.constant 0 : i32
    %c0_i32_1 = arith.constant 0 : i32
    return %c0_i32, %c0_i32_0 : i32, i32
  }
  func.func @transform_4(%arg0: i32, %arg1: i32) -> (i32, i32, i32) {
    %c0_i32 = arith.constant 0 : i32
    %c0_i32_0 = arith.constant 0 : i32
    %c0_i32_1 = arith.constant 0 : i32
    return %arg0, %c0_i32, %c0_i32_0 : i32, i32, i32
  }
}

</mosaic_0001>

<llo_original>
// kernel: tpu_custom_call.1
$region0: #{tpu_custom_call.1}
  #allocation0 [shape = 'u32[]', space=smem, size = 0x4, offset = 0x4, fixed_abs, tag = 'smem constant byte address 0x4 - core index']
  #allocation1 [shape = 'u32[72,128]{1,0:T(1,128)}', space=vmem, size = 0x9000, scoped, tag = 'internal scratch']
  #allocation2 [shape = 'f32[4,1]{1,0:T(4,128)}', space=vmem, size = 0x800, scoped, tag = 'scratch operand']
  #allocation3 [shape = 'f32[1,256]{1,0:T(1,128)}', space=vmem, size = 0x400, scoped, tag = 'scratch operand']
  #allocation4 [shape = 'f32[1,256]{1,0:T(1,128)}', space=vmem, size = 0x400, scoped, tag = 'scratch operand']
  %s0 = inlined_call_operand.hbm [shape: f32[2,4,256], index: 0, kind: input, shape index: {}]
  %s1 = inlined_call_operand.hbm [shape: f32[2,4,256], index: 1, kind: input, shape index: {}]
  %s2 = inlined_call_operand.hbm [shape: f32[2,1,32], index: 2, kind: input, shape index: {}]
  %s3 = inlined_call_operand.hbm [shape: f32[4,32], index: 3, kind: input, shape index: {}]
  %s4 = inlined_call_operand.hbm [shape: f32[2,1,128], index: 4, kind: output, shape index: {}]
  %s5 = sld [smem:[#allocation0]]
  $region73: #{tpu_custom_call.1} parent=0
    _
  %s7 = ssub.s32 1, %s5
  %s8 = scalar_select 0, %s7, %s5
  $region1: #{tpu_custom_call.1} parent=0
    #allocation5 [shape = 'u8[4096]{0}', space=vmem, size = 0x1000, scoped, tag = 'input window, operand 0']
    #allocation6 [shape = 's32[2]{0}', space=sflag, size = 0x8, scoped, tag = 'scoped memory for tpu_custom_call.1']
    #allocation7 [shape = 's32[2]{0}', space=sflag, size = 0x8, scoped, tag = 'scoped memory for tpu_custom_call.1']
    #allocation8 [shape = 'u8[4096]{0}', space=vmem, size = 0x1000, scoped, tag = 'input window, operand 1']
    #allocation9 [shape = 's32[2]{0}', space=sflag, size = 0x8, scoped, tag = 'scoped memory for tpu_custom_call.1']
    #allocation10 [shape = 'u8[1024]{0}', space=vmem, size = 0x400, scoped, tag = 'input window, operand 2']
    #allocation11 [shape = 'u8[2048]{0}', space=vmem, size = 0x800, scoped, tag = 'input window, operand 3, single buffered']
    #allocation12 [shape = 's32[1]{0}', space=sflag, size = 0x4, scoped, tag = 'scoped memory for tpu_custom_call.1']
    #allocation13 [shape = 'u8[1024]{0}', space=vmem, size = 0x400, scoped, tag = 'output window, operand 0']
    %9 = vsyncpa [#allocation6], 0
    %s10 = scalar_lea.sflag [#allocation6], 1
    %11 = vsyncpa %s10, 0
    %12 = vsyncpa [#allocation9], 0
    %s13 = scalar_lea.sflag [#allocation9], 1
    %14 = vsyncpa %s13, 0
    %15 = vsyncpa [#allocation12], 0
    %16 = vsyncpa [#allocation7], 0
    %s17 = scalar_lea.sflag [#allocation7], 1
    %18 = vsyncpa %s17, 0
    loop: start=0, step=1, limit=6
    $region2: #{tpu_custom_call.1} parent=1 // loop_pre_header
      _
    $region3: #{tpu_custom_call.1} parent=1 // loop_header
      %s20 = sphi 0, %s24
      %p21 = scmp.ge.s32.totalorder %s20, 6
      %s27 = sphi 0, %s39
      %s28 = sphi 0, %s35
      %s29 = sphi 0, %s27
      %s30 = sphi 0, %s28
      %s31 = sphi 0, %s29
      %s32 = sphi 0, %s30
      %s44 = sphi 0, %s46
      %s47 = sphi 0, %s44
      %s48 = sphi 0, %s47
      %s64 = sphi 0, %s48
      %s72 = sphi 0, %s74
      %s75 = sphi 0, %s72
      %s76 = sphi 0, %s75
      %s92 = sphi 0, %s76
      %s98 = sphi 0, %s100
      %s101 = sphi 0, %s98
      %s102 = sphi 0, %s101
      %s118 = sphi 0, %s102
      %s122 = sphi 0, %s122
      %s124 = sphi 0, %s122
      %s125 = sphi 0, %s124
      %s139 = sphi 0, %s125
      %s145 = sphi 0, %s147
      %s148 = sphi 0, %s145
      %s149 = sphi 0, %s148
      %s165 = sphi 0, %s149
    $region4: #{tpu_custom_call.1} parent=1 // loop_header_branch
      %23 = sbr.rel (%p21) target = $region8
    $region5: #{tpu_custom_call.1} parent=1 // loop_body
      %s25 = ssub.s32 %s20, 1
      %s26 = ssub.s32 %s20, 2
      %s33 = sadd.s32 1, %s28
      %p34 = scmp.ge.s32.totalorder %s33, 2
      %s35 = scalar_select %p34, 0, %s33
      %s36 = sadd.s32 1, %s27
      %s37 = scalar_select %p34, %s36, %s27
      %p38 = scmp.ge.s32.totalorder %s37, 2
      %s39 = scalar_select %p38, 0, %s37
      %s40 = ssub.s32 %s27, %s39
      %s41 = ssub.s32 %s28, %s35
      %s42 = sor.u32 %s40, %s41
      %p43 = scmp.eq.s32.totalorder %s42, 0
      %s45 = sadd.s32 %s44, 1
      %s46 = scalar_select %p43, %s44, %s45
      %p49 = pneg %p43
      %p50 = scmp.eq.s32.totalorder %s20, 3
      %p51 = por %p49, %p50
      %p52 = scmp.ne.s32.totalorder %s44, %s47
      %p53 = scmp.eq.s32.totalorder %s20, 0
      %p54 = por %p52, %p53
      %p55 = scmp.ne.s32.totalorder %s44, %s47
      %p56 = scmp.eq.s32.totalorder %s25, 3
      %p57 = por %p55, %p56
      %p58 = scmp.ne.s32.totalorder %s47, %s48
      %p59 = scmp.eq.s32.totalorder %s25, 0
      %p60 = por %p58, %p59
      %p61 = scmp.ne.s32.totalorder %s47, %s48
      %p62 = scmp.eq.s32.totalorder %s26, 3
      %p63 = por %p61, %p62
      %p65 = scmp.ne.s32.totalorder %s48, %s64
      %p66 = scmp.eq.s32.totalorder %s26, 0
      %p67 = por %p65, %p66
      %s68 = ssub.s32 %s27, %s39
      %s69 = ssub.s32 %s28, %s35
      %s70 = sor.u32 %s68, %s69
      %p71 = scmp.eq.s32.totalorder %s70, 0
      %s73 = sadd.s32 %s72, 1
      %s74 = scalar_select %p71, %s72, %s73
      %p77 = pneg %p71
      %p78 = scmp.eq.s32.totalorder %s20, 3
      %p79 = por %p77, %p78
      %p80 = scmp.ne.s32.totalorder %s72, %s75
      %p81 = scmp.eq.s32.totalorder %s20, 0
      %p82 = por %p80, %p81
      %p83 = scmp.ne.s32.totalorder %s72, %s75
      %p84 = scmp.eq.s32.totalorder %s25, 3
      %p85 = por %p83, %p84
      %p86 = scmp.ne.s32.totalorder %s75, %s76
      %p87 = scmp.eq.s32.totalorder %s25, 0
      %p88 = por %p86, %p87
      %p89 = scmp.ne.s32.totalorder %s75, %s76
      %p90 = scmp.eq.s32.totalorder %s26, 3
      %p91 = por %p89, %p90
      %p93 = scmp.ne.s32.totalorder %s76, %s92
      %p94 = scmp.eq.s32.totalorder %s26, 0
      %p95 = por %p93, %p94
      %s96 = ssub.s32 %s27, %s39
      %p97 = scmp.eq.s32.totalorder %s96, 0
      %s99 = sadd.s32 %s98, 1
      %s100 = scalar_select %p97, %s98, %s99
      %p103 = pneg %p97
      %p104 = scmp.eq.s32.totalorder %s20, 3
      %p105 = por %p103, %p104
      %p106 = scmp.ne.s32.totalorder %s98, %s101
      %p107 = scmp.eq.s32.totalorder %s20, 0
      %p108 = por %p106, %p107
      %p109 = scmp.ne.s32.totalorder %s98, %s101
      %p110 = scmp.eq.s32.totalorder %s25, 3
      %p111 = por %p109, %p110
      %p112 = scmp.ne.s32.totalorder %s101, %s102
      %p113 = scmp.eq.s32.totalorder %s25, 0
      %p114 = por %p112, %p113
      %p115 = scmp.ne.s32.totalorder %s101, %s102
      %p116 = scmp.eq.s32.totalorder %s26, 3
      %p117 = por %p115, %p116
      %p119 = scmp.ne.s32.totalorder %s102, %s118
      %p120 = scmp.eq.s32.totalorder %s26, 0
      %p121 = por %p119, %p120
      %s123 = sadd.s32 %s122, 1
      %p126 = scmp.eq.s32.totalorder %s20, 3
      %p127 = scmp.ne.s32.totalorder %s122, %s124
      %p128 = scmp.eq.s32.totalorder %s20, 0
      %p129 = por %p127, %p128
      %p130 = scmp.ne.s32.totalorder %s122, %s124
      %p131 = scmp.eq.s32.totalorder %s25, 3
      %p132 = por %p130, %p131
      %p133 = scmp.ne.s32.totalorder %s124, %s125
      %p134 = scmp.eq.s32.totalorder %s25, 0
      %p135 = por %p133, %p134
      %p136 = scmp.ne.s32.totalorder %s124, %s125
      %p137 = scmp.eq.s32.totalorder %s26, 3
      %p138 = por %p136, %p137
      %p140 = scmp.ne.s32.totalorder %s125, %s139
      %p141 = scmp.eq.s32.totalorder %s26, 0
      %p142 = por %p140, %p141
      %s143 = ssub.s32 %s27, %s39
      %p144 = scmp.eq.s32.totalorder %s143, 0
      %s146 = sadd.s32 %s145, 1
      %s147 = scalar_select %p144, %s145, %s146
      %p150 = pneg %p144
      %p151 = scmp.eq.s32.totalorder %s20, 3
      %p152 = por %p150, %p151
      %p153 = scmp.ne.s32.totalorder %s145, %s148
      %p154 = scmp.eq.s32.totalorder %s20, 0
      %p155 = por %p153, %p154
      %p156 = scmp.ne.s32.totalorder %s145, %s148
      %p157 = scmp.eq.s32.totalorder %s25, 3
      %p158 = por %p156, %p157
      %p159 = scmp.ne.s32.totalorder %s148, %s149
      %p160 = scmp.eq.s32.totalorder %s25, 0
      %p161 = por %p159, %p160
      %p162 = scmp.ne.s32.totalorder %s148, %s149
      %p163 = scmp.eq.s32.totalorder %s26, 3
      %p164 = por %p162, %p163
      %p166 = scmp.ne.s32.totalorder %s149, %s165
      %p167 = scmp.eq.s32.totalorder %s26, 0
      %p168 = por %p166, %p167
      %p169 = scmp.le.s32.totalorder 1, %s20
      %p170 = scmp.lt.s32.totalorder %s20, 5
      %p171 = pnand %p169, %p170
      %p172 = pneg %p171
      // Predicated region
      $region9: #{tpu_custom_call.1} parent=5 // pred_check
        _
      $region10: #{tpu_custom_call.1} parent=5 // pred_check_branch
        %174 = sbr.rel (%p171) target = $region12
      $region11: #{tpu_custom_call.1} parent=5 // pred_region
        %s175 = ssub.s32 %s20, 1
        // Predicated region
        $region13: #{tpu_custom_call.1} parent=11 // pred_check
          %p176 = pneg %p135
        $region14: #{tpu_custom_call.1} parent=11 // pred_check_branch
          %178 = sbr.rel (%p176) target = $region16
        $region15: #{tpu_custom_call.1} parent=11 // pred_region
          %180 = vsyncadd [#allocation12], 0
          %s182 = sshll.u32 %s3, 4
          %s183 = int_to_ptr.hbm [resolvable:$true] %s182
          %s184 = sshll.u32 [#allocation11], 4
          %s185 = int_to_ptr.vmem [resolvable:$true] %s184
          %187 = dma.hbm_to_vmem [thread:$0]  %s183, 64, %s185, [#allocation12]
        $region16: #{tpu_custom_call.1} parent=11 // pred_fallthru
          _
      $region12: #{tpu_custom_call.1} parent=5 // pred_fallthru
        _
      %p188 = scmp.lt.s32.totalorder %s20, 4
      // Predicated region
      $region17: #{tpu_custom_call.1} parent=5 // pred_check
        %p189 = pneg %p188
      $region18: #{tpu_custom_call.1} parent=5 // pred_check_branch
        %191 = sbr.rel (%p189) target = $region20
      $region19: #{tpu_custom_call.1} parent=5 // pred_region
        // Predicated region
        $region21: #{tpu_custom_call.1} parent=19 // pred_check
          %p192 = pneg %p54
        $region22: #{tpu_custom_call.1} parent=19 // pred_check_branch
          %194 = sbr.rel (%p192) target = $region24
        $region23: #{tpu_custom_call.1} parent=19 // pred_region
          %s195 = sand.u32 %s44, 1
          %s196 = scalar_lea.sflag [#allocation6], %s195
          %s197 = sand.u32 %s44, 1
          %s198 = smul.addr %s197, 4
          %s199 = scalar_lea.vmem [#allocation5], %s198
          %201 = vsyncadd %s196, 0
          %s202 = smul.addr %s27, 2
          %s203 = sadd.s32 %s28, %s202
          %s204 = smul.addr %s203, 4
          %s205 = scalar_lea.hbm %s0, %s204
          %s207 = sshll.u32 %s205, 4
          %s208 = int_to_ptr.hbm [resolvable:$true] %s207
          %s209 = sshll.u32 %s199, 4
          %s210 = int_to_ptr.vmem [resolvable:$true] %s209
          %212 = dma.hbm_to_vmem [thread:$0]  %s208, 64, %s210, %s196
        $region24: #{tpu_custom_call.1} parent=19 // pred_fallthru
          _
        // Predicated region
        $region25: #{tpu_custom_call.1} parent=19 // pred_check
          %p213 = pneg %p82
        $region26: #{tpu_custom_call.1} parent=19 // pred_check_branch
          %215 = sbr.rel (%p213) target = $region28
        $region27: #{tpu_custom_call.1} parent=19 // pred_region
          %s216 = sand.u32 %s20, 1
          %s217 = scalar_lea.sflag [#allocation9], %s216
          %s218 = sand.u32 %s72, 1
          %s219 = smul.addr %s218, 4
          %s220 = scalar_lea.vmem [#allocation8], %s219
          %222 = vsyncadd %s217, 0
          %s223 = smul.addr %s27, 2
          %s224 = sadd.s32 %s28, %s223
          %s225 = smul.addr %s224, 4
          %s226 = scalar_lea.hbm %s1, %s225
          %s228 = sshll.u32 %s226, 4
          %s229 = int_to_ptr.hbm [resolvable:$true] %s228
          %s230 = sshll.u32 %s220, 4
          %s231 = int_to_ptr.vmem [resolvable:$true] %s230
          %233 = dma.hbm_to_vmem [thread:$0]  %s229, 64, %s231, %s217
        $region28: #{tpu_custom_call.1} parent=19 // pred_fallthru
          _
        // Predicated region
        $region29: #{tpu_custom_call.1} parent=19 // pred_check
          %p234 = pneg %p108
        $region30: #{tpu_custom_call.1} parent=19 // pred_check_branch
          %236 = sbr.rel (%p234) target = $region32
        $region31: #{tpu_custom_call.1} parent=19 // pred_region
          %s237 = sand.u32 %s20, 1
          %s238 = scalar_lea.sflag [#allocation9], %s237
          %s239 = sand.u32 %s98, 1
          %s240 = scalar_lea.vmem [#allocation10], %s239
          %242 = vsyncadd %s238, 0
          %s243 = scalar_lea.hbm %s2, %s27
          %s245 = sshll.u32 %s243, 4
          %s246 = int_to_ptr.hbm [resolvable:$true] %s245
          %s247 = sshll.u32 %s240, 4
          %s248 = int_to_ptr.vmem [resolvable:$true] %s247
          %250 = dma.hbm_to_vmem [thread:$0]  %s246, 16, %s248, %s238
        $region32: #{tpu_custom_call.1} parent=19 // pred_fallthru
          _
      $region20: #{tpu_custom_call.1} parent=5 // pred_fallthru
        _
      %p251 = scmp.le.s32.totalorder 1, %s20
      %p252 = scmp.lt.s32.totalorder %s20, 5
      %p253 = pnand %p251, %p252
      %p254 = pneg %p253
      // Predicated region
      $region33: #{tpu_custom_call.1} parent=5 // pred_check
        _
      $region34: #{tpu_custom_call.1} parent=5 // pred_check_branch
        %256 = sbr.rel (%p253) target = $region36
      $region35: #{tpu_custom_call.1} parent=5 // pred_region
        %s257 = ssub.s32 %s20, 1
        %s258 = sand.u32 %s47, 1
        %s259 = scalar_lea.sflag [#allocation6], %s258
        %s260 = sand.u32 %s47, 1
        %s261 = smul.addr %s260, 4
        %s262 = scalar_lea.vmem [#allocation5], %s261
        // Predicated region
        $region37: #{tpu_custom_call.1} parent=35 // pred_check
          %p263 = pneg %p60
        $region38: #{tpu_custom_call.1} parent=35 // pred_check_branch
          %265 = sbr.rel (%p263) target = $region40
        $region39: #{tpu_custom_call.1} parent=35 // pred_region
          %267 = dma.done %s259, 64
        $region40: #{tpu_custom_call.1} parent=35 // pred_fallthru
          _
        %s268 = sand.u32 %s25, 1
        %s269 = scalar_lea.sflag [#allocation9], %s268
        %s270 = sand.u32 %s75, 1
        %s271 = smul.addr %s270, 4
        %s272 = scalar_lea.vmem [#allocation8], %s271
        // Predicated region
        $region41: #{tpu_custom_call.1} parent=35 // pred_check
          %p273 = pneg %p88
        $region42: #{tpu_custom_call.1} parent=35 // pred_check_branch
          %275 = sbr.rel (%p273) target = $region44
        $region43: #{tpu_custom_call.1} parent=35 // pred_region
          %277 = dma.done %s269, 64
        $region44: #{tpu_custom_call.1} parent=35 // pred_fallthru
          _
        %s278 = sand.u32 %s25, 1
        %s279 = scalar_lea.sflag [#allocation9], %s278
        %s280 = sand.u32 %s101, 1
        %s281 = scalar_lea.vmem [#allocation10], %s280
        // Predicated region
        $region45: #{tpu_custom_call.1} parent=35 // pred_check
          %p282 = pneg %p114
        $region46: #{tpu_custom_call.1} parent=35 // pred_check_branch
          %284 = sbr.rel (%p282) target = $region48
        $region47: #{tpu_custom_call.1} parent=35 // pred_region
          %286 = dma.done %s279, 16
        $region48: #{tpu_custom_call.1} parent=35 // pred_fallthru
          _
        // Predicated region
        $region49: #{tpu_custom_call.1} parent=35 // pred_check
          %p287 = pneg %p135
        $region50: #{tpu_custom_call.1} parent=35 // pred_check_branch
          %289 = sbr.rel (%p287) target = $region52
        $region51: #{tpu_custom_call.1} parent=35 // pred_region
          %291 = dma.done [#allocation12], 64
        $region52: #{tpu_custom_call.1} parent=35 // pred_fallthru
          _
        %s292 = sand.u32 %s47, 1
        %s293 = scalar_lea.sflag [#allocation6], %s292
        %s294 = sand.u32 %s47, 1
        %s295 = smul.addr %s294, 4
        %s296 = scalar_lea.vmem [#allocation5], %s295
        %p297 = pneg %p60
        %p298 = pneg %p57
        %s299 = sand.u32 %s25, 1
        %s300 = scalar_lea.sflag [#allocation9], %s299
        %s301 = sand.u32 %s75, 1
        %s302 = smul.addr %s301, 4
        %s303 = scalar_lea.vmem [#allocation8], %s302
        %p304 = pneg %p88
        %p305 = pneg %p85
        %s306 = sand.u32 %s25, 1
        %s307 = scalar_lea.sflag [#allocation9], %s306
        %s308 = sand.u32 %s101, 1
        %s309 = scalar_lea.vmem [#allocation10], %s308
        %p310 = pneg %p114
        %p311 = pneg %p111
        %p312 = pneg %p135
        %p313 = pneg %p132
        %p314 = pneg %p161
        %p315 = pneg %p158
        %s316 = sand.u32 %s148, 1
        %s317 = scalar_lea.sflag [#allocation7], %s316
        %s318 = sand.u32 %s148, 1
        %s319 = scalar_lea.vmem [#allocation13], %s318
        %p320 = scmp.eq.s32.totalorder %s30, 0
        // Predicated region
        $region53: #{tpu_custom_call.1} parent=35 // pred_check
          %p321 = pneg %p320
        $region54: #{tpu_custom_call.1} parent=35 // pred_check_branch
          %323 = sbr.rel (%p321) target = $region56
        $region55: #{tpu_custom_call.1} parent=35 // pred_region
          %v324 = vld [vmem:[%s281] sm:$0x1]
          %v325 = vld [vmem:[#allocation11] sm:$0xf]
          %v327 = vperm.slane %v324, 0
          %v329 = vmul.f32 %v325, %v327
          %vm330 = vcmask 257024
          %v331 = vsel %vm330, %v329, 0.0
          %332 = vadd.xlane.f32.xlu0 %v331
          %v333 = vpop.xlane.xlu0 %332
          %vm334 = vcmask 3072
          %335 = vst.msk [vmem:[#allocation2] sm:$0xf] %vm334, %v333
        $region56: #{tpu_custom_call.1} parent=35 // pred_fallthru
          _
        %v336 = vld [vmem:[#allocation2] sm:$0xf]
        %v337 = vld [vmem:[%s262] sm:$0xf]
        %v338 = vld [vmem:[%s272] sm:$0xf]
        %340 = vset.pattern.permute.xlu0 0
        %341 = vperm.xlu0 %340, %v336
        %v342 = vpop.permute.xlu0 %341
        %v344 = vmul.f32 %v342, %v337
        %vm345 = vcmask 1043456
        %v346 = vsel %vm345, %v344, 0.0
        %v347 = vrot.slane %v346, 4
        %v348 = vadd.f32 %v346, %v347
        %v349 = vrot.slane %v348, 2
        %v350 = vadd.f32 %v348, %v349
        %v351 = vrot.slane %v350, 1
        %v352 = vadd.f32 %v350, %v351
        %v353 = vmul.f32 %v342, %v338
        %v354 = vsel %vm345, %v353, 0.0
        %v355 = vrot.slane %v354, 4
        %v356 = vadd.f32 %v354, %v355
        %v357 = vrot.slane %v356, 2
        %v358 = vadd.f32 %v356, %v357
        %v359 = vrot.slane %v358, 1
        %v360 = vadd.f32 %v358, %v359
        %s361 = smul.u32 %s30, 128
        %s362 = sshra.s32 %s361, 7
        %s363 = sand.u32 %s361, 127
        %s364 = scalar_lea.vmem [#allocation3], %s362
        %v365 = vlaneseq
        %vm366 = vcmp.ge.s32.totalorder %v365, 0
        %vm367 = vcmp.lt.s32.totalorder %v365, 128
        %vm368 = vmand %vm366, %vm367
        %369 = vst.msk [vmem:[%s364] sm:$0x1] %vm368, %v352
        %s370 = scalar_lea.vmem [#allocation4], %s362
        %371 = vst.msk [vmem:[%s370] sm:$0x1] %vm368, %v360
        %p372 = scmp.eq.s32.totalorder %s30, 1
        // Predicated region
        $region57: #{tpu_custom_call.1} parent=35 // pred_check
          %p373 = pneg %p372
        $region58: #{tpu_custom_call.1} parent=35 // pred_check_branch
          %375 = sbr.rel (%p373) target = $region60
        $region59: #{tpu_custom_call.1} parent=35 // pred_region
          %v376 = vld [vmem:[#allocation3] sm:$0x3]
          %v378 = vperm.slane %v376, 0
          %v379 = vperm.slane %v376, 1
          %vm382 = vcmask 1040384
          %v383 = vsel %vm382, %v378, -inf
          %v384 = vsel %vm382, %v379, -inf
          %v385 = vmax.f32 %v383, %v384
          %386 = vmax.xlane.f32.xlu0 %v385
          %v387 = vpop.xlane.xlu0 %386
          %v389 = vperm.slane %v387, 0
          %v391 = vsub.f32 %v376, %v389
          %v392 = vmul.f32 %v391, 1.442695
          %v393 = vpow.pop %v392
          %v395 = vperm.slane %v393, 0
          %v396 = vperm.slane %v393, 1
          %v399 = vsel %vm382, %v395, 0.0
          %v400 = vsel %vm382, %v396, 0.0
          %v401 = vadd.f32 %v399, %v400
          %402 = vadd.xlane.f32.xlu0 %v401
          %v403 = vpop.xlane.xlu0 %402
          %v405 = vperm.slane %v403, 0
          %v407 = vrcp.pop %v405
          %v408 = vmul.f32 %v405, %v407
          %v409 = vsub.f32 1.0, %v408
          %v410 = vmul.f32 %v407, %v409
          %v411 = vadd.f32 %v407, %v410
          %vm412 = vweird.f32 %v405
          %vm413 = vweird.f32 %v407
          %vm414 = vmor %vm412, %vm413
          %v415 = vsel %vm414, %v407, %v411
          %v416 = vand.u32 2147483647, %v405
          %vm417 = vcmp.eq.f32.partialorder %v416, 8.507059e+37
          %v418 = vand.u32 %v405, 2147483648
          %v419 = vor.u32 1.1754944e-38, %v418
          %v420 = vsel %vm417, %v419, %v415
          %v421 = vmul.f32 %v393, %v420
          %v422 = vld [vmem:[#allocation4] sm:$0x3]
          %v424 = vperm.slane %v422, 0
          %v425 = vperm.slane %v422, 1
          %v428 = vsel %vm382, %v424, -inf
          %v429 = vsel %vm382, %v425, -inf
          %v430 = vmax.f32 %v428, %v429
          %431 = vmax.xlane.f32.xlu0 %v430
          %v432 = vpop.xlane.xlu0 %431
          %v434 = vperm.slane %v432, 0
          %v436 = vsub.f32 %v422, %v434
          %v437 = vmul.f32 %v436, 1.442695
          %v438 = vpow.pop %v437
          %v440 = vperm.slane %v438, 0
          %v441 = vperm.slane %v438, 1
          %v444 = vsel %vm382, %v440, 0.0
          %v445 = vsel %vm382, %v441, 0.0
          %v446 = vadd.f32 %v444, %v445
          %447 = vadd.xlane.f32.xlu0 %v446
          %v448 = vpop.xlane.xlu0 %447
          %v450 = vperm.slane %v448, 0
          %v452 = vrcp.pop %v450
          %v453 = vmul.f32 %v450, %v452
          %v454 = vsub.f32 1.0, %v453
          %v455 = vmul.f32 %v452, %v454
          %v456 = vadd.f32 %v452, %v455
          %vm457 = vweird.f32 %v450
          %vm458 = vweird.f32 %v452
          %vm459 = vmor %vm457, %vm458
          %v460 = vsel %vm459, %v452, %v456
          %v461 = vand.u32 2147483647, %v450
          %vm462 = vcmp.eq.f32.partialorder %v461, 8.507059e+37
          %v463 = vand.u32 %v450, 2147483648
          %v464 = vor.u32 1.1754944e-38, %v463
          %v465 = vsel %vm462, %v464, %v460
          %v466 = vmul.f32 %v438, %v465
          %v467 = vsub.f32 %v421, %v466
          %v468 = vmul.f32 %v467, %v467
          %v470 = vperm.slane %v468, 0
          %v471 = vperm.slane %v468, 1
          %v474 = vsel %vm382, %v470, 0.0
          %v475 = vsel %vm382, %v471, 0.0
          %v476 = vadd.f32 %v474, %v475
          %477 = vadd.xlane.f32.xlu0 %v476
          %v478 = vpop.xlane.xlu0 %477
          %v479 = vmul.f32 %v478, 0.001953125
          %480 = vst [vmem:[%s319] sm:$0x1] %v479
        $region60: #{tpu_custom_call.1} parent=35 // pred_fallthru
          _
        %s481 = sand.u32 %s148, 1
        %s482 = scalar_lea.sflag [#allocation7], %s481
        %s483 = sand.u32 %s148, 1
        %s484 = scalar_lea.vmem [#allocation13], %s483
        // Predicated region
        $region61: #{tpu_custom_call.1} parent=35 // pred_check
          %p485 = pneg %p158
        $region62: #{tpu_custom_call.1} parent=35 // pred_check_branch
          %487 = sbr.rel (%p485) target = $region64
        $region63: #{tpu_custom_call.1} parent=35 // pred_region
          %489 = vsyncadd %s482, 0
          %s490 = scalar_lea.hbm %s4, %s29
          %s492 = sshll.u32 %s484, 4
          %s493 = int_to_ptr.vmem [resolvable:$true] %s492
          %s494 = sshll.u32 %s490, 4
          %s495 = int_to_ptr.hbm [resolvable:$true] %s494
          %497 = dma.vmem_to_hbm [thread:$0]  %s493, 16, %s495, %s482
        $region64: #{tpu_custom_call.1} parent=35 // pred_fallthru
          _
      $region36: #{tpu_custom_call.1} parent=5 // pred_fallthru
        _
      %p498 = scmp.le.s32.totalorder 2, %s20
      // Predicated region
      $region65: #{tpu_custom_call.1} parent=5 // pred_check
        %p499 = pneg %p498
      $region66: #{tpu_custom_call.1} parent=5 // pred_check_branch
        %501 = sbr.rel (%p499) target = $region68
      $region67: #{tpu_custom_call.1} parent=5 // pred_region
        %s502 = ssub.s32 %s20, 2
        // Predicated region
        $region69: #{tpu_custom_call.1} parent=67 // pred_check
          %p503 = pneg %p164
        $region70: #{tpu_custom_call.1} parent=67 // pred_check_branch
          %505 = sbr.rel (%p503) target = $region72
        $region71: #{tpu_custom_call.1} parent=67 // pred_region
          %s506 = sand.u32 %s149, 1
          %s507 = scalar_lea.sflag [#allocation7], %s506
          %s508 = sand.u32 %s149, 1
          %s509 = scalar_lea.vmem [#allocation13], %s508
          %511 = dma.done %s507, 16
        $region72: #{tpu_custom_call.1} parent=67 // pred_fallthru
          _
      $region68: #{tpu_custom_call.1} parent=5 // pred_fallthru
        _
    $region6: #{tpu_custom_call.1} parent=1 // loop_footer
      %s24 = sadd.s32 1, %s20
    $region7: #{tpu_custom_call.1} parent=1 // loop_footer_branch
      %19 = sbr.rel target = $region3
    $region8: #{tpu_custom_call.1} parent=1 // loop_exit
      _
    %512 = vsyncpa [#allocation6], 1
    %s513 = scalar_lea.sflag [#allocation6], 1
    %514 = vsyncpa %s513, 1
    %515 = vsyncpa [#allocation9], 1
    %s516 = scalar_lea.sflag [#allocation9], 1
    %517 = vsyncpa %s516, 1
    %518 = vsyncpa [#allocation12], 1
    %519 = vsyncpa [#allocation7], 1
    %s520 = scalar_lea.sflag [#allocation7], 1
    %521 = vsyncpa %s520, 1

</llo_original>
